<compile_context>
chip_gen: v5e
topology: v5e:2x2
jax: 0.10.0
libtpu: 0.0.40
codegen_flags: <defaults>
</compile_context>

<pallas_src>
import jax
import jax.numpy as jnp
from jax.experimental import pallas as pl
from jax.experimental.pallas import tpu as pltpu


# ---------------------------------------------------------------------------
# Kernels
# ---------------------------------------------------------------------------
def _xw1_kernel(x_ref, w1_ref, xw1_ref):
    """XW1 row tile = X_tile @ W1 (f32 accumulate, bf16 out for the MXU)."""
    xw1_ref[...] = jnp.dot(
        x_ref[...], w1_ref[...], preferred_element_type=jnp.float32
    ).astype(xw1_ref.dtype)


def _layer1_kernel(a_ref, xw1_ref, w2_ref, l1w2_ref, acc_ref):
    """L1W2 row tile = relu(sum_k A[i,k] @ XW1[k]) @ W2."""
    k = pl.program_id(1)

    @pl.when(k == 0)
    def _():
        acc_ref[...] = jnp.zeros_like(acc_ref)

    acc_ref[...] += jnp.dot(
        a_ref[...], xw1_ref[...], preferred_element_type=jnp.float32
    )

    @pl.when(k == pl.num_programs(1) - 1)
    def _():
        l1 = jnp.maximum(acc_ref[...], 0.0).astype(jnp.bfloat16)
        l1w2_ref[...] = jnp.dot(
            l1, w2_ref[...], preferred_element_type=jnp.float32
        ).astype(l1w2_ref.dtype)


def _layer2_kernel(a_ref, l1w2_ref, x_ref, w3_ref, out_ref, acc_ref):
    """out row tile = relu(sum_k A[i,k] @ L1W2[k] + X_tile @ W3)."""
    k = pl.program_id(1)

    @pl.when(k == 0)
    def _():
        # Seed the accumulator with the skip term (computed in-kernel -> no
        # XW3 intermediate round-trip through HBM).  Tiny matmul, kept f32.
        acc_ref[...] = jnp.dot(
            x_ref[...], w3_ref[...], preferred_element_type=jnp.float32
        )

    acc_ref[...] += jnp.dot(
        a_ref[...], l1w2_ref[...], preferred_element_type=jnp.float32
    )

    @pl.when(k == pl.num_programs(1) - 1)
    def _():
        out_ref[...] = jnp.maximum(acc_ref[...], 0.0).astype(out_ref.dtype)


# ---------------------------------------------------------------------------
# Wrapper
# ---------------------------------------------------------------------------
def _round_up(n, m):
    return (n + m - 1) // m * m


def sp_skip_gcn_forward(ahat, node_feats, w1, w2, w3, *, tile=256, hp=128):
    N, F = node_feats.shape
    H1 = w1.shape[1]
    H2 = w2.shape[1]
    assert ahat.shape == (N, N)
    assert w1.shape == (F, H1)
    assert w2.shape == (H1, H2)
    assert w3.shape == (F, H2)
    assert H1 <= hp and H2 <= hp

    # Square tiles on Ahat: rows (parallel) x cols (reduction). Multiple of 8.
    tile = min(tile, _round_up(N, 8))
    n_pad = _round_up(N, tile)
    nt = n_pad // tile          # row tiles
    nk = n_pad // tile          # reduction (column) tiles

    f32, bf16 = jnp.float32, jnp.bfloat16

    # Zero-pad to n_pad rows/cols (extra rows produce zeros, sliced off later)
    # and zero-pad hidden dims to a lane-dense 128.
    a_p = jnp.pad(ahat.astype(f32), ((0, n_pad - N), (0, n_pad - N))).astype(bf16)
    x_p = jnp.pad(node_feats.astype(f32), ((0, n_pad - N), (0, 0)))
    w1_p = jnp.zeros((F, hp), f32).at[:, :H1].set(w1.astype(f32))
    w2_p = jnp.zeros((hp, hp), f32).at[:H1, :H2].set(w2.astype(f32)).astype(bf16)
    w3_p = jnp.zeros((F, hp), f32).at[:, :H2].set(w3.astype(f32))

    cp1 = pltpu.CompilerParams(
        dimension_semantics=("parallel",),
        vmem_limit_bytes=48 << 20,
    )
    cp2 = pltpu.CompilerParams(
        dimension_semantics=("parallel", "arbitrary"),
        vmem_limit_bytes=48 << 20,
    )

    # -- pass 0: XW1 = X @ W1  (tiny, row-tiled, bf16 out) ---------------------
    xw1 = pl.pallas_call(
        _xw1_kernel,
        out_shape=jax.ShapeDtypeStruct((n_pad, hp), bf16),
        grid=(nt,),
        in_specs=[
            pl.BlockSpec((tile, F), lambda i: (i, 0)),
            pl.BlockSpec((F, hp), lambda i: (0, 0)),          # resident W1
        ],
        out_specs=pl.BlockSpec((tile, hp), lambda i: (i, 0)),
        compiler_params=cp1,
    )(x_p, w1_p)

    # -- pass 1: L1W2 = relu(Ahat @ XW1) @ W2  (stream A in (tile, tile) blocks)
    l1w2 = pl.pallas_call(
        _layer1_kernel,
        out_shape=jax.ShapeDtypeStruct((n_pad, hp), bf16),
        grid=(nt, nk),
        in_specs=[
            pl.BlockSpec((tile, tile), lambda i, k: (i, k)),  # streamed A block
            pl.BlockSpec((tile, hp), lambda i, k: (k, 0)),    # streamed XW1 block
            pl.BlockSpec((hp, hp), lambda i, k: (0, 0)),      # resident W2
        ],
        out_specs=pl.BlockSpec((tile, hp), lambda i, k: (i, 0)),
        scratch_shapes=[pltpu.VMEM((tile, hp), f32)],
        compiler_params=cp2,
    )(a_p, xw1, w2_p)

    # -- pass 2: out = relu(Ahat @ L1W2 + X @ W3) ------------------------------
    out_p = pl.pallas_call(
        _layer2_kernel,
        out_shape=jax.ShapeDtypeStruct((n_pad, hp), f32),
        grid=(nt, nk),
        in_specs=[
            pl.BlockSpec((tile, tile), lambda i, k: (i, k)),  # streamed A block
            pl.BlockSpec((tile, hp), lambda i, k: (k, 0)),    # streamed L1W2 block
            pl.BlockSpec((tile, F), lambda i, k: (i, 0)),     # X row tile (skip)
            pl.BlockSpec((F, hp), lambda i, k: (0, 0)),       # resident W3
        ],
        out_specs=pl.BlockSpec((tile, hp), lambda i, k: (i, 0)),
        scratch_shapes=[pltpu.VMEM((tile, hp), f32)],
        compiler_params=cp2,
    )(a_p, l1w2, x_p, w3_p)

    return out_p[:N, :H2]


def _reset_param(key, shape):
    # mirrors u.reset_param: uniform(-stdv, stdv), stdv = 1/sqrt(fan_in-ish)
    stdv = 1.0 / jnp.sqrt(jnp.float32(shape[0]))
    return jax.random.uniform(key, shape, jnp.float32, -stdv, stdv)


if __name__ == "__main__":
    key = jax.random.PRNGKey(0)
    k_a, k_x, k_w1, k_w2, k_w3 = jax.random.split(key, 5)

    N = 512           # number of nodes (2x2 grid of 256-tiles over Ahat)
    F = 64            # feats_per_node
    H = 32            # layer_1_feats == layer_2_feats

    # deterministic synthetic normalized adjacency (dense stand-in for sparse Ahat)
    raw = jax.random.uniform(k_a, (N, N), jnp.float32)
    adj = (raw > 0.9).astype(jnp.float32)
    adj = adj + adj.T + jnp.eye(N, dtype=jnp.float32)
    deg = jnp.sum(adj, axis=1, keepdims=True)
    ahat = adj / jnp.maximum(deg, 1.0)

    node_feats = jax.random.normal(k_x, (N, F), jnp.float32)
    w1 = _reset_param(k_w1, (F, H))   # w_list[0]
    w2 = _reset_param(k_w2, (H, H))   # w_list[1]
    w3 = _reset_param(k_w3, (F, H))   # W_feat (skip weight)

    out = sp_skip_gcn_forward(ahat, node_feats, w1, w2, w3)
    out = jax.block_until_ready(out)

    # pure-JAX f32 reference (kernel uses bf16 adjacency/activations -> looser tol)
    relu = lambda t: jnp.maximum(t, 0.0)
    l1_ref = relu(ahat @ (node_feats @ w1))
    l2_ref = relu(ahat @ (l1_ref @ w2) + node_feats @ w3)
    assert out.shape == (N, H)
    assert jnp.allclose(out, l2_ref, atol=2e-2, rtol=2e-2), float(
        jnp.max(jnp.abs(out - l2_ref))
    )

    print("KERNEL_OK")
</pallas_src>

<mosaic_0001>
module attributes {stable_mosaic.version = 11 : i64} {
  func.func @_xw1_kernel(%arg0: i32, %arg1: memref<256x64xf32, #tpu.memory_space<vmem>>, %arg2: memref<64x128xf32, #tpu.memory_space<vmem>>, %arg3: memref<256x128xbf16, #tpu.memory_space<vmem>>) attributes {dimension_semantics = [#tpu.dimension_semantics<parallel>], iteration_bounds = array<i64: 2>, scalar_prefetch = 0 : i64, scratch_operands = 0 : i64, tpu.core_type = #tpu.core_type<tc>, window_params = [{transform_indices = @transform_0, window_bounds = array<i64: 256, 64>}, {pipeline_mode = #tpu.pipeline_mode<synchronous>, transform_indices = @transform_1, window_bounds = array<i64: 64, 128>}, {transform_indices = @transform_2, window_bounds = array<i64: 256, 128>}]} {
    %c0 = arith.constant 0 : index
    %c0_0 = arith.constant 0 : index
    %0 = vector.load %arg1[%c0, %c0_0] : memref<256x64xf32, #tpu.memory_space<vmem>>, vector<256x64xf32>
    %c0_1 = arith.constant 0 : index
    %c0_2 = arith.constant 0 : index
    %1 = vector.load %arg2[%c0_1, %c0_2] : memref<64x128xf32, #tpu.memory_space<vmem>>, vector<64x128xf32>
    %cst = arith.constant dense<0.000000e+00> : vector<256x128xf32>
    %2 = tpu.matmul %0, %1, %cst {dimension_numbers = #tpu.dot_dimension_numbers<[1], [0], [0], [1], [0, 0, 1, 1], [], []>} : vector<256x64xf32>, vector<64x128xf32>, vector<256x128xf32> -> vector<256x128xf32>
    %3 = arith.truncf %2 : vector<256x128xf32> to vector<256x128xbf16>
    %c0_3 = arith.constant 0 : index
    %c0_4 = arith.constant 0 : index
    %4 = vector.load %arg3[%c0_3, %c0_4] : memref<256x128xbf16, #tpu.memory_space<vmem>>, vector<256x128xbf16>
    tpu.vector_store %arg3[%c0_3, %c0_4], %3 {strides = array<i32>} : memref<256x128xbf16, #tpu.memory_space<vmem>>, vector<256x128xbf16>,
    return
  }
  func.func @transform_0(%arg0: i32) -> (i32, i32) {
    %c0_i32 = arith.constant 0 : i32
    %c0_i32_0 = arith.constant 0 : i32
    return %arg0, %c0_i32 : i32, i32
  }
  func.func @transform_1(%arg0: i32) -> (i32, i32) {
    %c0_i32 = arith.constant 0 : i32
    %c0_i32_0 = arith.constant 0 : i32
    %c0_i32_1 = arith.constant 0 : i32
    return %c0_i32, %c0_i32_0 : i32, i32
  }
  func.func @transform_2(%arg0: i32) -> (i32, i32) {
    %c0_i32 = arith.constant 0 : i32
    %c0_i32_0 = arith.constant 0 : i32
    return %arg0, %c0_i32 : i32, i32
  }
}

</mosaic_0001>

<llo_original>
// kernel: tpu_custom_call.1
$region0: #{tpu_custom_call.1}
  #allocation0 [shape = 'u32[]', space=smem, size = 0x4, offset = 0x4, fixed_abs, tag = 'smem constant byte address 0x4 - core index']
  #allocation1 [shape = 'u32[72,128]{1,0:T(1,128)}', space=vmem, size = 0x9000, scoped, tag = 'internal scratch']
  %s0 = inlined_call_operand.vmem [shape: f32[512,64], index: 0, kind: input, shape index: {}]
  %s1 = inlined_call_operand.vmem [shape: f32[64,128], index: 1, kind: input, shape index: {}]
  %s2 = inlined_call_operand.hbm [shape: bf16[512,128], index: 2, kind: output, shape index: {}]
  %s3 = sld [smem:[#allocation0]]
  $region41: #{tpu_custom_call.1} parent=0
    _
  %s5 = ssub.s32 1, %s3
  %s6 = scalar_select 0, %s5, %s3
  $region1: #{tpu_custom_call.1} parent=0
    #allocation2 [shape = 'u8[131072]{0}', space=vmem, size = 0x20000, scoped, tag = 'output window, operand 0']
    #allocation3 [shape = 's32[2]{0}', space=sflag, size = 0x8, scoped, tag = 'scoped memory for tpu_custom_call.1']
    %7 = vsyncpa [#allocation3], 0
    %s8 = scalar_lea.sflag [#allocation3], 1
    %9 = vsyncpa %s8, 0
    loop: start=0, step=1, limit=4
    $region2: #{tpu_custom_call.1} parent=1 // loop_pre_header
      _
    $region3: #{tpu_custom_call.1} parent=1 // loop_header
      %s11 = sphi 0, %s15
      %p12 = scmp.ge.s32.totalorder %s11, 4
      %s21 = sphi 0, %s23
      %s24 = sphi 0, %s21
      %s25 = sphi 0, %s24
      %s41 = sphi 0, %s25
      %s45 = sphi 0, %s45
      %s47 = sphi 0, %s45
      %s48 = sphi 0, %s47
      %s62 = sphi 0, %s48
      %s68 = sphi 0, %s70
      %s71 = sphi 0, %s68
      %s72 = sphi 0, %s71
      %s88 = sphi 0, %s72
    $region4: #{tpu_custom_call.1} parent=1 // loop_header_branch
      %14 = sbr.rel (%p12) target = $region8
    $region5: #{tpu_custom_call.1} parent=1 // loop_body
      %s16 = ssub.s32 %s11, 1
      %s17 = ssub.s32 %s11, 2
      %s18 = sadd.s32 %s11, 1
      %s19 = ssub.s32 %s11, %s18
      %p20 = scmp.eq.s32.totalorder %s19, 0
      %s22 = sadd.s32 %s21, 1
      %s23 = scalar_select %p20, %s21, %s22
      %p26 = pneg %p20
      %p27 = scmp.eq.s32.totalorder %s11, 1
      %p28 = por %p26, %p27
      %p29 = scmp.ne.s32.totalorder %s21, %s24
      %p30 = scmp.eq.s32.totalorder %s11, 0
      %p31 = por %p29, %p30
      %p32 = scmp.ne.s32.totalorder %s21, %s24
      %p33 = scmp.eq.s32.totalorder %s16, 1
      %p34 = por %p32, %p33
      %p35 = scmp.ne.s32.totalorder %s24, %s25
      %p36 = scmp.eq.s32.totalorder %s16, 0
      %p37 = por %p35, %p36
      %p38 = scmp.ne.s32.totalorder %s24, %s25
      %p39 = scmp.eq.s32.totalorder %s17, 1
      %p40 = por %p38, %p39
      %p42 = scmp.ne.s32.totalorder %s25, %s41
      %p43 = scmp.eq.s32.totalorder %s17, 0
      %p44 = por %p42, %p43
      %s46 = sadd.s32 %s45, 1
      %p49 = scmp.eq.s32.totalorder %s11, 1
      %p50 = scmp.ne.s32.totalorder %s45, %s47
      %p51 = scmp.eq.s32.totalorder %s11, 0
      %p52 = por %p50, %p51
      %p53 = scmp.ne.s32.totalorder %s45, %s47
      %p54 = scmp.eq.s32.totalorder %s16, 1
      %p55 = por %p53, %p54
      %p56 = scmp.ne.s32.totalorder %s47, %s48
      %p57 = scmp.eq.s32.totalorder %s16, 0
      %p58 = por %p56, %p57
      %p59 = scmp.ne.s32.totalorder %s47, %s48
      %p60 = scmp.eq.s32.totalorder %s17, 1
      %p61 = por %p59, %p60
      %p63 = scmp.ne.s32.totalorder %s48, %s62
      %p64 = scmp.eq.s32.totalorder %s17, 0
      %p65 = por %p63, %p64
      %s66 = ssub.s32 %s11, %s18
      %p67 = scmp.eq.s32.totalorder %s66, 0
      %s69 = sadd.s32 %s68, 1
      %s70 = scalar_select %p67, %s68, %s69
      %p73 = pneg %p67
      %p74 = scmp.eq.s32.totalorder %s11, 1
      %p75 = por %p73, %p74
      %p76 = scmp.ne.s32.totalorder %s68, %s71
      %p77 = scmp.eq.s32.totalorder %s11, 0
      %p78 = por %p76, %p77
      %p79 = scmp.ne.s32.totalorder %s68, %s71
      %p80 = scmp.eq.s32.totalorder %s16, 1
      %p81 = por %p79, %p80
      %p82 = scmp.ne.s32.totalorder %s71, %s72
      %p83 = scmp.eq.s32.totalorder %s16, 0
      %p84 = por %p82, %p83
      %p85 = scmp.ne.s32.totalorder %s71, %s72
      %p86 = scmp.eq.s32.totalorder %s17, 1
      %p87 = por %p85, %p86
      %p89 = scmp.ne.s32.totalorder %s72, %s88
      %p90 = scmp.eq.s32.totalorder %s17, 0
      %p91 = por %p89, %p90
      %p92 = scmp.le.s32.totalorder 1, %s11
      %p93 = scmp.lt.s32.totalorder %s11, 3
      %p94 = pnand %p92, %p93
      %p95 = pneg %p94
      // Predicated region
      $region9: #{tpu_custom_call.1} parent=5 // pred_check
        _
      $region10: #{tpu_custom_call.1} parent=5 // pred_check_branch
        %97 = sbr.rel (%p94) target = $region12
      $region11: #{tpu_custom_call.1} parent=5 // pred_region
        %s98 = ssub.s32 %s11, 1
        // Predicated region
        $region13: #{tpu_custom_call.1} parent=11 // pred_check
          %p99 = pneg %p58
        $region14: #{tpu_custom_call.1} parent=11 // pred_check_branch
          %101 = sbr.rel (%p99) target = $region16
        $region15: #{tpu_custom_call.1} parent=11 // pred_region
          _
        $region16: #{tpu_custom_call.1} parent=11 // pred_fallthru
          _
      $region12: #{tpu_custom_call.1} parent=5 // pred_fallthru
        _
      %p102 = scmp.lt.s32.totalorder %s11, 2
      // Predicated region
      $region17: #{tpu_custom_call.1} parent=5 // pred_check
        %p103 = pneg %p102
      $region18: #{tpu_custom_call.1} parent=5 // pred_check_branch
        %105 = sbr.rel (%p103) target = $region20
      $region19: #{tpu_custom_call.1} parent=5 // pred_region
        // Predicated region
        $region21: #{tpu_custom_call.1} parent=19 // pred_check
          %p106 = pneg %p31
        $region22: #{tpu_custom_call.1} parent=19 // pred_check_branch
          %108 = sbr.rel (%p106) target = $region24
        $region23: #{tpu_custom_call.1} parent=19 // pred_region
          %s109 = smul.u32 32, %s11
          %p110 = scmp.lt.s32.totalorder %s109, 63
          %s111 = scalar_select %p110, %s109, 63
          %s112 = smul.addr %s111, 8
          %s113 = scalar_lea.vmem %s0, %s112
          %s114 = smul.u32 32, %s11
        $region24: #{tpu_custom_call.1} parent=19 // pred_fallthru
          _
      $region20: #{tpu_custom_call.1} parent=5 // pred_fallthru
        _
      %p115 = scmp.le.s32.totalorder 1, %s11
      %p116 = scmp.lt.s32.totalorder %s11, 3
      %p117 = pnand %p115, %p116
      %p118 = pneg %p117
      // Predicated region
      $region25: #{tpu_custom_call.1} parent=5 // pred_check
        _
      $region26: #{tpu_custom_call.1} parent=5 // pred_check_branch
        %120 = sbr.rel (%p117) target = $region28
      $region27: #{tpu_custom_call.1} parent=5 // pred_region
        %s121 = ssub.s32 %s11, 1
        %s122 = smul.u32 32, %s16
        %p123 = scmp.lt.s32.totalorder %s122, 63
        %s124 = scalar_select %p123, %s122, 63
        %s125 = smul.addr %s124, 8
        %s126 = scalar_lea.vmem %s0, %s125
        %p127 = pneg %p37
        %p128 = pneg %p34
        %p129 = pneg %p58
        %p130 = pneg %p55
        %p131 = pneg %p84
        %p132 = pneg %p81
        %s133 = sand.u32 %s71, 1
        %s134 = scalar_lea.sflag [#allocation3], %s133
        %s135 = sand.u32 %s71, 1
        %s136 = smul.addr %s135, 128
        %s137 = scalar_lea.vmem [#allocation2], %s136
        %s138 = smul.u32 32, %s16
        %p139 = scmp.lt.s32.totalorder %s138, 63
        %s140 = scalar_select %p139, %s138, 63
        %s141 = smul.addr %s140, 8
        %s142 = scalar_lea.vmem %s0, %s141
        %s143 = smul.u32 32, %s16
        %s144 = smul.u32 32, %s16
        %v145 = vld [vmem:[%s142] sm:$0xff]
        %v146 = vld [vmem:[%s142 + $0x8] sm:$0xff]
        %v147 = vld [vmem:[%s142 + $0x10] sm:$0xff]
        %v148 = vld [vmem:[%s142 + $0x18] sm:$0xff]
        %v149 = vld [vmem:[%s142 + $0x20] sm:$0xff]
        %v150 = vld [vmem:[%s142 + $0x28] sm:$0xff]
        %v151 = vld [vmem:[%s142 + $0x30] sm:$0xff]
        %v152 = vld [vmem:[%s142 + $0x38] sm:$0xff]
        %v153 = vld [vmem:[%s142 + $0x40] sm:$0xff]
        %v154 = vld [vmem:[%s142 + $0x48] sm:$0xff]
        %v155 = vld [vmem:[%s142 + $0x50] sm:$0xff]
        %v156 = vld [vmem:[%s142 + $0x58] sm:$0xff]
        %v157 = vld [vmem:[%s142 + $0x60] sm:$0xff]
        %v158 = vld [vmem:[%s142 + $0x68] sm:$0xff]
        %v159 = vld [vmem:[%s142 + $0x70] sm:$0xff]
        %v160 = vld [vmem:[%s142 + $0x78] sm:$0xff]
        %v161 = vld [vmem:[%s142 + $0x80] sm:$0xff]
        %v162 = vld [vmem:[%s142 + $0x88] sm:$0xff]
        %v163 = vld [vmem:[%s142 + $0x90] sm:$0xff]
        %v164 = vld [vmem:[%s142 + $0x98] sm:$0xff]
        %v165 = vld [vmem:[%s142 + $0xa0] sm:$0xff]
        %v166 = vld [vmem:[%s142 + $0xa8] sm:$0xff]
        %v167 = vld [vmem:[%s142 + $0xb0] sm:$0xff]
        %v168 = vld [vmem:[%s142 + $0xb8] sm:$0xff]
        %v169 = vld [vmem:[%s142 + $0xc0] sm:$0xff]
        %v170 = vld [vmem:[%s142 + $0xc8] sm:$0xff]
        %v171 = vld [vmem:[%s142 + $0xd0] sm:$0xff]
        %v172 = vld [vmem:[%s142 + $0xd8] sm:$0xff]
        %v173 = vld [vmem:[%s142 + $0xe0] sm:$0xff]
        %v174 = vld [vmem:[%s142 + $0xe8] sm:$0xff]
        %v175 = vld [vmem:[%s142 + $0xf0] sm:$0xff]
        %v176 = vld [vmem:[%s142 + $0xf8] sm:$0xff]
        %v177 = vld [vmem:[%s1] sm:$0xff]
        %v178 = vld [vmem:[%s1 + $0x8] sm:$0xff]
        %v179 = vld [vmem:[%s1 + $0x10] sm:$0xff]
        %v180 = vld [vmem:[%s1 + $0x18] sm:$0xff]
        %v181 = vld [vmem:[%s1 + $0x20] sm:$0xff]
        %v182 = vld [vmem:[%s1 + $0x28] sm:$0xff]
        %v183 = vld [vmem:[%s1 + $0x30] sm:$0xff]
        %v184 = vld [vmem:[%s1 + $0x38] sm:$0xff]
        %vm185 = vcmask 523264
        %v187 = vsel %vm185, %v145, 0
        %v190 = vsel %vm185, %v146, 0
        %v193 = vsel %vm185, %v147, 0
        %v196 = vsel %vm185, %v148, 0
        %v199 = vsel %vm185, %v149, 0
        %v202 = vsel %vm185, %v150, 0
        %v205 = vsel %vm185, %v151, 0
        %v208 = vsel %vm185, %v152, 0
        %v211 = vsel %vm185, %v153, 0
        %v214 = vsel %vm185, %v154, 0
        %v217 = vsel %vm185, %v155, 0
        %v220 = vsel %vm185, %v156, 0
        %v223 = vsel %vm185, %v157, 0
        %v226 = vsel %vm185, %v158, 0
        %v229 = vsel %vm185, %v159, 0
        %v232 = vsel %vm185, %v160, 0
        %v235 = vsel %vm185, %v161, 0
        %v238 = vsel %vm185, %v162, 0
        %v241 = vsel %vm185, %v163, 0
        %v244 = vsel %vm185, %v164, 0
        %v247 = vsel %vm185, %v165, 0
        %v250 = vsel %vm185, %v166, 0
        %v253 = vsel %vm185, %v167, 0
        %v256 = vsel %vm185, %v168, 0
        %v259 = vsel %vm185, %v169, 0
        %v262 = vsel %vm185, %v170, 0
        %v265 = vsel %vm185, %v171, 0
        %v268 = vsel %vm185, %v172, 0
        %v271 = vsel %vm185, %v173, 0
        %v274 = vsel %vm185, %v174, 0
        %v277 = vsel %vm185, %v175, 0
        %v280 = vsel %vm185, %v176, 0
        %282 = vmatpush.msra.mxu0 0.0
        %283 = vmatpush.msra.mxu0 0.0
        %284 = vmatpush.msra.mxu0 0.0
        %285 = vmatpush.msra.mxu0 0.0
        %286 = vmatpush.msra.mxu0 0.0
        %287 = vmatpush.msra.mxu0 0.0
        %288 = vmatpush.msra.mxu0 0.0
        %289 = vmatpush.msra.mxu0 0.0
        %290 = vmatpush.msra.mxu0 %v184
        %291 = vmatpush.msra.mxu0 %v183
        %292 = vmatpush.msra.mxu0 %v182
        %293 = vmatpush.msra.mxu0 %v181
        %294 = vmatpush.msra.mxu0 %v180
        %295 = vmatpush.msra.mxu0 %v179
        %296 = vmatpush.msra.mxu0 %v178
        %297 = vmatpush.msra.mxu0 %v177
        %298 = vmatmul.f32.gmra.mxu0 %v187
        %v299 = vpop.f32.mrf.mxu0
        %v300 = vadd.f32 0.0, %v299
        %301 = vmatmul.f32.gmra.mxu0 %v190
        %v302 = vpop.f32.mrf.mxu0
        %v303 = vadd.f32 0.0, %v302
        %304 = vmatmul.f32.gmra.mxu0 %v193
        %v305 = vpop.f32.mrf.mxu0
        %v306 = vadd.f32 0.0, %v305
        %307 = vmatmul.f32.gmra.mxu0 %v196
        %v308 = vpop.f32.mrf.mxu0
        %v309 = vadd.f32 0.0, %v308
        %310 = vmatmul.f32.gmra.mxu0 %v199
        %v311 = vpop.f32.mrf.mxu0
        %v312 = vadd.f32 0.0, %v311
        %313 = vmatmul.f32.gmra.mxu0 %v202
        %v314 = vpop.f32.mrf.mxu0
        %v315 = vadd.f32 0.0, %v314
        %316 = vmatmul.f32.gmra.mxu0 %v205
        %v317 = vpop.f32.mrf.mxu0
        %v318 = vadd.f32 0.0, %v317
        %319 = vmatmul.f32.gmra.mxu0 %v208
        %v320 = vpop.f32.mrf.mxu0
        %v321 = vadd.f32 0.0, %v320
        %322 = vmatmul.f32.gmra.mxu0 %v211
        %v323 = vpop.f32.mrf.mxu0
        %v324 = vadd.f32 0.0, %v323
        %325 = vmatmul.f32.gmra.mxu0 %v214
        %v326 = vpop.f32.mrf.mxu0
        %v327 = vadd.f32 0.0, %v326
        %328 = vmatmul.f32.gmra.mxu0 %v217
        %v329 = vpop.f32.mrf.mxu0
        %v330 = vadd.f32 0.0, %v329
        %331 = vmatmul.f32.gmra.mxu0 %v220
        %v332 = vpop.f32.mrf.mxu0
        %v333 = vadd.f32 0.0, %v332
        %334 = vmatmul.f32.gmra.mxu0 %v223
        %v335 = vpop.f32.mrf.mxu0
        %v336 = vadd.f32 0.0, %v335
        %337 = vmatmul.f32.gmra.mxu0 %v226
        %v338 = vpop.f32.mrf.mxu0
        %v339 = vadd.f32 0.0, %v338
        %340 = vmatmul.f32.gmra.mxu0 %v229
        %v341 = vpop.f32.mrf.mxu0
        %v342 = vadd.f32 0.0, %v341
        %343 = vmatmul.f32.gmra.mxu0 %v232
        %v344 = vpop.f32.mrf.mxu0
        %v345 = vadd.f32 0.0, %v344
        %346 = vmatmul.f32.gmra.mxu0 %v235
        %v347 = vpop.f32.mrf.mxu0
        %v348 = vadd.f32 0.0, %v347
        %349 = vmatmul.f32.gmra.mxu0 %v238
        %v350 = vpop.f32.mrf.mxu0
        %v351 = vadd.f32 0.0, %v350
        %352 = vmatmul.f32.gmra.mxu0 %v241
        %v353 = vpop.f32.mrf.mxu0
        %v354 = vadd.f32 0.0, %v353
        %355 = vmatmul.f32.gmra.mxu0 %v244
        %v356 = vpop.f32.mrf.mxu0
        %v357 = vadd.f32 0.0, %v356
        %358 = vmatmul.f32.gmra.mxu0 %v247
        %v359 = vpop.f32.mrf.mxu0
        %v360 = vadd.f32 0.0, %v359
        %361 = vmatmul.f32.gmra.mxu0 %v250
        %v362 = vpop.f32.mrf.mxu0
        %v363 = vadd.f32 0.0, %v362
        %364 = vmatmul.f32.gmra.mxu0 %v253
        %v365 = vpop.f32.mrf.mxu0
        %v366 = vadd.f32 0.0, %v365
        %367 = vmatmul.f32.gmra.mxu0 %v256
        %v368 = vpop.f32.mrf.mxu0
        %v369 = vadd.f32 0.0, %v368
        %370 = vmatmul.f32.gmra.mxu0 %v259
        %v371 = vpop.f32.mrf.mxu0
        %v372 = vadd.f32 0.0, %v371
        %373 = vmatmul.f32.gmra.mxu0 %v262
        %v374 = vpop.f32.mrf.mxu0
        %v375 = vadd.f32 0.0, %v374
        %376 = vmatmul.f32.gmra.mxu0 %v265
        %v377 = vpop.f32.mrf.mxu0
        %v378 = vadd.f32 0.0, %v377
        %379 = vmatmul.f32.gmra.mxu0 %v268
        %v380 = vpop.f32.mrf.mxu0
        %v381 = vadd.f32 0.0, %v380
        %382 = vmatmul.f32.gmra.mxu0 %v271
        %v383 = vpop.f32.mrf.mxu0
        %v384 = vadd.f32 0.0, %v383
        %385 = vmatmul.f32.gmra.mxu0 %v274
        %v386 = vpop.f32.mrf.mxu0
        %v387 = vadd.f32 0.0, %v386
        %388 = vmatmul.f32.gmra.mxu0 %v277
        %v389 = vpop.f32.mrf.mxu0
        %v390 = vadd.f32 0.0, %v389
        %391 = vmatmul.f32.gmra.mxu0 %v280
        %v392 = vpop.f32.mrf.mxu0
        %v393 = vadd.f32 0.0, %v392
        %394 = vdwg.mxu0
        %v395 = vpack.c.bf16 %v300, %v300
        %v396 = vpack.c.bf16 %v303, %v303
        %v397 = vpack.c.bf16 %v306, %v306
        %v398 = vpack.c.bf16 %v309, %v309
        %v399 = vpack.c.bf16 %v312, %v312
        %v400 = vpack.c.bf16 %v315, %v315
        %v401 = vpack.c.bf16 %v318, %v318
        %v402 = vpack.c.bf16 %v321, %v321
        %v403 = vpack.c.bf16 %v324, %v324
        %v404 = vpack.c.bf16 %v327, %v327
        %v405 = vpack.c.bf16 %v330, %v330
        %v406 = vpack.c.bf16 %v333, %v333
        %v407 = vpack.c.bf16 %v336, %v336
        %v408 = vpack.c.bf16 %v339, %v339
        %v409 = vpack.c.bf16 %v342, %v342
        %v410 = vpack.c.bf16 %v345, %v345
        %v411 = vpack.c.bf16 %v348, %v348
        %v412 = vpack.c.bf16 %v351, %v351
        %v413 = vpack.c.bf16 %v354, %v354
        %v414 = vpack.c.bf16 %v357, %v357
        %v415 = vpack.c.bf16 %v360, %v360
        %v416 = vpack.c.bf16 %v363, %v363
        %v417 = vpack.c.bf16 %v366, %v366
        %v418 = vpack.c.bf16 %v369, %v369
        %v419 = vpack.c.bf16 %v372, %v372
        %v420 = vpack.c.bf16 %v375, %v375
        %v421 = vpack.c.bf16 %v378, %v378
        %v422 = vpack.c.bf16 %v381, %v381
        %v423 = vpack.c.bf16 %v384, %v384
        %v424 = vpack.c.bf16 %v387, %v387
        %v425 = vpack.c.bf16 %v390, %v390
        %v426 = vpack.c.bf16 %v393, %v393
        %427 = vst [vmem:[%s137] sm:$0xf] %v395
        %428 = vst [vmem:[%s137 + $0x4] sm:$0xf] %v396
        %429 = vst [vmem:[%s137 + $0x8] sm:$0xf] %v397
        %430 = vst [vmem:[%s137 + $0xc] sm:$0xf] %v398
        %431 = vst [vmem:[%s137 + $0x10] sm:$0xf] %v399
        %432 = vst [vmem:[%s137 + $0x14] sm:$0xf] %v400
        %433 = vst [vmem:[%s137 + $0x18] sm:$0xf] %v401
        %434 = vst [vmem:[%s137 + $0x1c] sm:$0xf] %v402
        %435 = vst [vmem:[%s137 + $0x20] sm:$0xf] %v403
        %436 = vst [vmem:[%s137 + $0x24] sm:$0xf] %v404
        %437 = vst [vmem:[%s137 + $0x28] sm:$0xf] %v405
        %438 = vst [vmem:[%s137 + $0x2c] sm:$0xf] %v406
        %439 = vst [vmem:[%s137 + $0x30] sm:$0xf] %v407
        %440 = vst [vmem:[%s137 + $0x34] sm:$0xf] %v408
        %441 = vst [vmem:[%s137 + $0x38] sm:$0xf] %v409
        %442 = vst [vmem:[%s137 + $0x3c] sm:$0xf] %v410
        %443 = vst [vmem:[%s137 + $0x40] sm:$0xf] %v411
        %444 = vst [vmem:[%s137 + $0x44] sm:$0xf] %v412
        %445 = vst [vmem:[%s137 + $0x48] sm:$0xf] %v413
        %446 = vst [vmem:[%s137 + $0x4c] sm:$0xf] %v414
        %447 = vst [vmem:[%s137 + $0x50] sm:$0xf] %v415
        %448 = vst [vmem:[%s137 + $0x54] sm:$0xf] %v416
        %449 = vst [vmem:[%s137 + $0x58] sm:$0xf] %v417
        %450 = vst [vmem:[%s137 + $0x5c] sm:$0xf] %v418
        %451 = vst [vmem:[%s137 + $0x60] sm:$0xf] %v419
        %452 = vst [vmem:[%s137 + $0x64] sm:$0xf] %v420
        %453 = vst [vmem:[%s137 + $0x68] sm:$0xf] %v421
        %454 = vst [vmem:[%s137 + $0x6c] sm:$0xf] %v422
        %455 = vst [vmem:[%s137 + $0x70] sm:$0xf] %v423
        %456 = vst [vmem:[%s137 + $0x74] sm:$0xf] %v424
        %457 = vst [vmem:[%s137 + $0x78] sm:$0xf] %v425
        %458 = vst [vmem:[%s137 + $0x7c] sm:$0xf] %v426
        %s459 = sand.u32 %s71, 1
        %s460 = scalar_lea.sflag [#allocation3], %s459
        %s461 = sand.u32 %s71, 1
        %s462 = smul.addr %s461, 128
        %s463 = scalar_lea.vmem [#allocation2], %s462
        // Predicated region
        $region29: #{tpu_custom_call.1} parent=27 // pred_check
          %p464 = pneg %p81
        $region30: #{tpu_custom_call.1} parent=27 // pred_check_branch
          %466 = sbr.rel (%p464) target = $region32
        $region31: #{tpu_custom_call.1} parent=27 // pred_region
          %s467 = smul.u32 32, %s16
          %469 = vsyncadd %s460, 0
          %s470 = smul.addr %s467, 4
          %s471 = scalar_lea.hbm %s2, %s470
          %s472 = sshll.u32 %s463, 4
          %s473 = int_to_ptr.vmem [resolvable:$true] %s472
          %s474 = sshll.u32 %s471, 4
          %s475 = int_to_ptr.hbm [resolvable:$true] %s474
          %480 = dma.vmem_to_hbm [thread:$0]  %s473, 2048, %s475, %s460, 64, 64, 4
        $region32: #{tpu_custom_call.1} parent=27 // pred_fallthru
          _
      $region28: #{tpu_custom_call.1} parent=5 // pred_fallthru
        _
      %p481 = scmp.le.s32.totalorder 2, %s11
      // Predicated region
      $region33: #{tpu_custom_call.1} parent=5 // pred_check
        %p482 = pneg %p481
      $region34: #{tpu_custom_call.1} parent=5 // pred_check_branch
        %484 = sbr.rel (%p482) target = $region36
      $region35: #{tpu_custom_call.1} parent=5 // pred_region
        %s485 = ssub.s32 %s11, 2
        // Predicated region
        $region37: #{tpu_custom_call.1} parent=35 // pred_check
          %p486 = pneg %p87
        $region38: #{tpu_custom_call.1} parent=35 // pred_check_branch
          %488 = sbr.rel (%p486) target = $region40
        $region39: #{tpu_custom_call.1} parent=35 // pred_region
          %s489 = sand.u32 %s72, 1
          %s490 = scalar_lea.sflag [#allocation3], %s489
          %s491 = sand.u32 %s72, 1
          %s492 = smul.addr %s491, 128
          %s493 = scalar_lea.vmem [#allocation2], %s492
          %495 = dma.done %s490, 2048
        $region40: #{tpu_custom_call.1} parent=35 // pred_fallthru
          _
      $region36: #{tpu_custom_call.1} parent=5 // pred_fallthru
        _
    $region6: #{tpu_custom_call.1} parent=1 // loop_footer
      %s15 = sadd.s32 1, %s11
    $region7: #{tpu_custom_call.1} parent=1 // loop_footer_branch
      %10 = sbr.rel target = $region3
    $region8: #{tpu_custom_call.1} parent=1 // loop_exit
      _
    %496 = vsyncpa [#allocation3], 1
    %s497 = scalar_lea.sflag [#allocation3], 1
    %498 = vsyncpa %s497, 1

</llo_original>
